<compile_context>
chip_gen: v7x
topology: tpu7x:2x2x1
jax: 0.10.0
libtpu: 0.0.40
codegen_flags: <defaults>
</compile_context>

<pallas_src>
import functools
import math

import jax
import jax.numpy as jnp
from jax import lax
from jax.experimental import pallas as pl
from jax.experimental.pallas import tpu as pltpu


# -----------------------------------------------------------------------------
# VMEM limit (per generation)
# -----------------------------------------------------------------------------
_VMEM_LIMIT_CACHE = None


def _vmem_limit():
    global _VMEM_LIMIT_CACHE
    if _VMEM_LIMIT_CACHE is None:
        limit = 48 * 1024 * 1024                      # safe on all generations
        try:
            info = pltpu.get_tpu_info()
            cap = getattr(info, "vmem_capacity_bytes", None)
            if cap:
                limit = min((int(cap) * 3) // 4, 96 * 1024 * 1024)
        except Exception:
            pass
        _VMEM_LIMIT_CACHE = limit
    return _VMEM_LIMIT_CACHE


# -----------------------------------------------------------------------------
# Pallas kernels
# -----------------------------------------------------------------------------
def _conv3x3_kernel(x_ref, w_ref, b_ref, o_ref, sc_ref, *xcat_scratch,
                    wpad, th, w, fuse_dx):
    """Fused 3x3 conv + bias + ReLU on one flattened halo tile.

    x_ref : (1, lt, Cin)        bf16   lt = (th+3)*wpad flattened padded rows
    w_ref : (3, 3*Cin, Cout)    bf16   [dy, dx*Cin + c, o]
    b_ref : (1, Cout)           f32
    o_ref : (1, th, w, Cout)    bf16   junk columns already stripped
    sc_ref: (th*wpad, Cout)     bf16   staging scratch for the strip
    xcat_scratch (fuse_dx only): (lt, 3*Cin) bf16 lane-concat of the 3 dx taps

    The junk columns (cols w..wpad-1 of each flat row) read wrap-around rows;
    they stay in-bounds because lt = (th+3)*wpad >= th*wpad + 2*wpad + 3
    (the 2 bottom padding rows provide the slack).  Keep those tied together.
    """
    cin = x_ref.shape[2]
    cout = w_ref.shape[2]
    lt = x_ref.shape[1]
    tm = th * wpad

    acc = jnp.zeros((tm, cout), jnp.float32)
    if fuse_dx:
        xc = xcat_scratch[0]
        # Build the 3*Cin lane-concat once per tile (dx taps along K).
        xc[:, 0:cin] = x_ref[0]
        xc[0:lt - 1, cin:2 * cin] = x_ref[0, 1:lt, :]
        xc[0:lt - 2, 2 * cin:3 * cin] = x_ref[0, 2:lt, :]
        for dy in range(3):                           # 3 dots, K = 3*Cin
            win = xc[dy * wpad:dy * wpad + tm, :]
            acc = acc + jnp.dot(win, w_ref[dy],
                                preferred_element_type=jnp.float32)
    else:
        for dy in range(3):                           # 9 dots, K = Cin (>=256)
            for dx in range(3):
                off = dy * wpad + dx
                win = x_ref[0, off:off + tm, :]
                acc = acc + jnp.dot(win, w_ref[dy, dx * cin:(dx + 1) * cin, :],
                                    preferred_element_type=jnp.float32)

    res = jnp.maximum(acc + b_ref[...], 0.0).astype(jnp.bfloat16)
    # Strip the 2 junk columns per flat row in-kernel: stage the flat result in
    # VMEM, then copy the first `w` columns of each of the `th` rows out.
    sc_ref[...] = res
    for y in range(th):                               # static, unrolled (<=64)
        o_ref[0, y] = sc_ref[y * wpad:y * wpad + w, :]


def _conv1_gemm_kernel(x_ref, w_ref, b_ref, o_ref):
    """conv1_1 (Cin=3) as a GEMM over host-side im2col patches (K=27->32)."""
    acc = jnp.dot(x_ref[...], w_ref[...], preferred_element_type=jnp.float32)
    acc = jnp.maximum(acc + b_ref[...], 0.0)
    o_ref[...] = acc.astype(o_ref.dtype)


def _maxpool_kernel(x_ref, o_ref, *, c):
    """MaxPool2d(2,2).  x_ref: (TR, 2, Wo, 2*C) ; o_ref: (TR, Wo, C)."""
    r = jnp.maximum(x_ref[:, 0], x_ref[:, 1])            # pool the two rows
    o_ref[...] = jnp.maximum(r[:, :, :c], r[:, :, c:])   # pool the two cols


# -----------------------------------------------------------------------------
# Tiling helpers
# -----------------------------------------------------------------------------
def _divisor_at_most(n, cap):
    d = max(1, min(n, cap))
    while n % d:
        d -= 1
    return d


def _pick_th(h, w, max_rows=2048, max_th=64):
    """Output rows per conv tile: TH | H, TH*(W+2) <= max_rows, TH <= max_th."""
    th = max(1, min(h, max_rows // (w + 2), max_th))
    while h % th:
        th -= 1
    return th


def _pick_gemm_tile(m, cap=2048):
    if m <= cap:
        return m
    d = min(m, cap)
    while d > 0:
        if m % d == 0 and d % 8 == 0:
            return d
        d -= 1
    return m


# -----------------------------------------------------------------------------
# Layer wrappers (host glue: padding, halo tiling, contiguous reshapes)
# -----------------------------------------------------------------------------
def _conv1_first_layer(x_nhwc, wg, b_row):
    """Cin=3 layer via im2col GEMM.  wg: (32, Cout) bf16 ; b_row: (1, Cout)."""
    n, h, w, cin = x_nhwc.shape
    kp, cout = wg.shape
    xp = jnp.pad(x_nhwc, ((0, 0), (1, 1), (1, 1), (0, 0)))
    cols = [xp[:, dy:dy + h, dx:dx + w, :] for dy in range(3) for dx in range(3)]
    xc = jnp.concatenate(cols, axis=-1)                       # (n,h,w,9*cin)
    if kp > 9 * cin:
        xc = jnp.pad(xc, ((0, 0), (0, 0), (0, 0), (0, kp - 9 * cin)))
    m = n * h * w
    xc = xc.reshape(m, kp).astype(jnp.bfloat16)
    tmg = _pick_gemm_tile(m)

    out = pl.pallas_call(
        _conv1_gemm_kernel,
        out_shape=jax.ShapeDtypeStruct((m, cout), jnp.bfloat16),
        grid=(m // tmg,),
        in_specs=[
            pl.BlockSpec((tmg, kp), lambda i: (i, 0)),
            pl.BlockSpec((kp, cout), lambda i: (0, 0)),
            pl.BlockSpec((1, cout), lambda i: (0, 0)),
        ],
        out_specs=pl.BlockSpec((tmg, cout), lambda i: (i, 0)),
        compiler_params=pltpu.CompilerParams(
            dimension_semantics=("parallel",),
            vmem_limit_bytes=_vmem_limit()),
        cost_estimate=pl.CostEstimate(
            flops=2 * m * kp * cout, transcendentals=0,
            bytes_accessed=m * kp * 2 + kp * cout * 2 + m * cout * 2),
    )(xc, wg, b_row)
    return out.reshape(n, h, w, cout)


def conv3x3_relu(x_nhwc, wq, b_row):
    """Conv3x3(pad=1) + bias + ReLU.  Returns bf16 NHWC.

    wq: (3, 3*Cin, Cout) bf16 for Cin>3, or (32, Cout) bf16 for the Cin=3 layer.
    """
    if wq.ndim == 2:
        return _conv1_first_layer(x_nhwc, wq, b_row)

    n, h, w, cin = x_nhwc.shape
    cout = wq.shape[2]
    assert wq.shape == (3, 3 * cin, cout)
    wp = w + 2
    th = _pick_th(h, w)
    gh = h // th
    tm = th * wp                 # output rows per tile (incl. junk cols)
    lt = (th + 3) * wp           # flat input rows per tile (halo + slack)
    assert lt >= tm + 2 * wp + 3  # junk columns must stay in-bounds
    fuse_dx = cin <= 128

    # pad (top 1 / bottom 2 rows, left 1 / right 1 cols) and cast for the MXU.
    xp = jnp.pad(x_nhwc, ((0, 0), (1, 2), (1, 1), (0, 0))).astype(jnp.bfloat16)
    if gh == 1:
        xt = xp.reshape(n, lt, cin)
    else:
        # TODO(synk): replace this host-side halo gather with in-kernel DMA.
        rows = (jnp.arange(gh)[:, None] * th
                + jnp.arange(th + 3)[None, :]).reshape(-1)
        xt = jnp.take(xp, rows, axis=1).reshape(n * gh, lt, cin)
    mt = n * gh

    scratch = [pltpu.VMEM((tm, cout), jnp.bfloat16)]          # strip staging
    if fuse_dx:
        scratch.append(pltpu.VMEM((lt, 3 * cin), jnp.bfloat16))

    flops = 2 * (n * h * w) * (9 * cin) * cout
    bytes_accessed = (xt.size * 2 + wq.size * 2 + b_row.size * 4
                      + mt * th * w * cout * 2)

    out = pl.pallas_call(
        functools.partial(_conv3x3_kernel, wpad=wp, th=th, w=w,
                          fuse_dx=fuse_dx),
        out_shape=jax.ShapeDtypeStruct((mt, th, w, cout), jnp.bfloat16),
        grid=(mt,),
        in_specs=[
            pl.BlockSpec((1, lt, cin), lambda i: (i, 0, 0)),
            pl.BlockSpec((3, 3 * cin, cout), lambda i: (0, 0, 0)),  # resident
            pl.BlockSpec((1, cout), lambda i: (0, 0)),
        ],
        out_specs=pl.BlockSpec((1, th, w, cout), lambda i: (i, 0, 0, 0)),
        scratch_shapes=scratch,
        compiler_params=pltpu.CompilerParams(
            dimension_semantics=("parallel",),
            vmem_limit_bytes=_vmem_limit()),
        cost_estimate=pl.CostEstimate(flops=flops, transcendentals=0,
                                      bytes_accessed=bytes_accessed),
    )(xt, wq, b_row)

    return out.reshape(n, h, w, cout)


def maxpool2x2(x_nhwc):
    """x: (N,H,W,C) (bf16 or f32), even H,W -> (N,H//2,W//2,C), same dtype."""
    n, h, w, c = x_nhwc.shape
    if h % 2 or w % 2:
        raise ValueError("maxpool2x2 requires even spatial dims")
    ho, wo = h // 2, w // 2
    rtot = n * ho
    xr = x_nhwc.reshape(rtot, 2, wo, 2 * c)               # contiguous (free)
    bytes_per_row = 2 * wo * 2 * c * x_nhwc.dtype.itemsize
    cap = max(1, (8 * 1024 * 1024) // bytes_per_row)
    tr = _divisor_at_most(rtot, min(cap, 512))

    out = pl.pallas_call(
        functools.partial(_maxpool_kernel, c=c),
        out_shape=jax.ShapeDtypeStruct((rtot, wo, c), x_nhwc.dtype),
        grid=(rtot // tr,),
        in_specs=[pl.BlockSpec((tr, 2, wo, 2 * c), lambda i: (i, 0, 0, 0))],
        out_specs=pl.BlockSpec((tr, wo, c), lambda i: (i, 0, 0)),
        compiler_params=pltpu.CompilerParams(
            dimension_semantics=("parallel",),
            vmem_limit_bytes=_vmem_limit()),
    )(xr)
    return out.reshape(n, ho, wo, c)


# -----------------------------------------------------------------------------
# VGG16 features (torchvision indexing); collected indices match the reference
# forward(): 1,4,6,9,11,13,16,18,20,23,25,27,30.
# -----------------------------------------------------------------------------
VGG16_CFG = [64, 64, "M", 128, 128, "M", 256, 256, 256, "M",
             512, 512, 512, "M", 512, 512, 512, "M"]
COLLECT_IDX = {1, 4, 6, 9, 11, 13, 16, 18, 20, 23, 25, 27, 30}


def init_vgg16_params(key):
    """Deterministic xavier-uniform conv weights + small uniform biases."""
    params = []
    cin = 3
    for c in VGG16_CFG:
        if c == "M":
            continue
        key, kw, kb = jax.random.split(key, 3)
        fan_in, fan_out = cin * 9, c * 9
        bound = math.sqrt(6.0 / (fan_in + fan_out))
        w = jax.random.uniform(kw, (c, cin, 3, 3), jnp.float32, -bound, bound)
        b = jax.random.uniform(kb, (c,), jnp.float32, -0.1, 0.1)
        params.append((w, b))
        cin = c
    return params


def prepare_params(params):
    """One-time weight repack.

    Cin==3 : (Cout,3,3,3) -> (32, Cout) bf16 (im2col GEMM weight, K padded).
    Cin>3  : (Cout,Cin,3,3) -> (3, 3*Cin, Cout) bf16 ([dy, dx*Cin+c, o]).
    Bias   : (Cout,) -> (1, Cout) f32.
    """
    prepared = []
    for w, b in params:
        cout, cin = w.shape[0], w.shape[1]
        b_row = b.reshape(1, cout).astype(jnp.float32)
        w_t = jnp.transpose(w, (2, 3, 1, 0))               # (3, 3, Cin, Cout)
        if cin == 3:
            wg = w_t.reshape(9 * cin, cout)
            wg = jnp.pad(wg, ((0, 32 - 9 * cin), (0, 0))).astype(jnp.bfloat16)
            prepared.append((wg, b_row))
        else:
            w3 = w_t.reshape(3, 3 * cin, cout).astype(jnp.bfloat16)
            prepared.append((w3, b_row))
    return prepared


def vgg16_forward(x_nchw, prepared):
    """Returns the 13 collected activations, each NCHW f32 (like PyTorch)."""
    x = jnp.transpose(x_nchw, (0, 2, 3, 1)).astype(jnp.float32)   # NCHW->NHWC
    outputs = []
    idx = 0
    conv_i = 0
    for c in VGG16_CFG:
        if c == "M":
            x = maxpool2x2(x)
            if idx in COLLECT_IDX:
                outputs.append(jnp.transpose(x, (0, 3, 1, 2)).astype(jnp.float32))
            idx += 1
        else:
            wq, b = prepared[conv_i]
            conv_i += 1
            x = conv3x3_relu(x, wq, b)          # Conv (idx) + ReLU (idx+1) fused
            idx += 1
            if idx in COLLECT_IDX:
                outputs.append(jnp.transpose(x, (0, 3, 1, 2)).astype(jnp.float32))
            idx += 1
    return outputs


# -----------------------------------------------------------------------------
# Pure-JAX reference for numerical self-checks (bf16 operands, f32 accumulate)
# -----------------------------------------------------------------------------
def _reference_conv_relu(x_nhwc, w_oihw, b):
    xr = x_nhwc.astype(jnp.bfloat16).astype(jnp.float32)
    wr = jnp.transpose(w_oihw, (2, 3, 1, 0)).astype(jnp.bfloat16).astype(jnp.float32)
    y = lax.conv_general_dilated(
        xr, wr, window_strides=(1, 1), padding="SAME",
        dimension_numbers=("NHWC", "HWIO", "NHWC"),
        precision=lax.Precision.HIGHEST)
    return jnp.maximum(y + b.reshape(1, 1, 1, -1), 0.0)


def _check_conv(x, w, b):
    wq, br = prepare_params([(w, b)])[0]
    out = conv3x3_relu(x, wq, br).astype(jnp.float32)
    ref = _reference_conv_relu(x, w, b)
    err = float(jnp.max(jnp.abs(out - ref)))
    scale = float(jnp.max(jnp.abs(ref)))
    assert err <= 2e-2 * (1.0 + scale), (err, scale)
    return out


# -----------------------------------------------------------------------------
if __name__ == "__main__":
    key = jax.random.PRNGKey(0)
    kx, kp = jax.random.split(key)

    # --- kernel self-checks -------------------------------------------------
    k1, k2, k3, k4, k5, k6 = jax.random.split(jax.random.PRNGKey(1), 6)
    # (a) Cin=3 im2col GEMM path
    _check_conv(jax.random.normal(k1, (1, 16, 16, 3), jnp.float32),
                jax.random.normal(k2, (64, 3, 3, 3), jnp.float32) * 0.2,
                jax.random.uniform(k2, (64,), jnp.float32, -0.1, 0.1))
    # (b) fused-dx path (Cin=64) with gh>1 halo gather
    _check_conv(jax.random.normal(k3, (1, 64, 64, 64), jnp.float32),
                jax.random.normal(k4, (128, 64, 3, 3), jnp.float32) * 0.05,
                jax.random.uniform(k4, (128,), jnp.float32, -0.1, 0.1))
    # (c) non-fused path (Cin=256 -> Cout=512), then the pool kernel
    yb = _check_conv(jax.random.normal(k5, (1, 8, 8, 256), jnp.float32),
                     jax.random.normal(k6, (512, 256, 3, 3), jnp.float32) * 0.03,
                     jax.random.uniform(k6, (512,), jnp.float32, -0.1, 0.1))
    yb = yb.astype(jnp.bfloat16)
    pref = yb.reshape(1, 4, 2, 4, 2, 512).max(axis=(2, 4))
    assert bool(jnp.array_equal(maxpool2x2(yb), pref))

    # --- full VGG16 features forward ----------------------------------------
    # smallest architecture-consistent input: 5 maxpools need spatial >= 32
    x = jax.random.normal(kx, (2, 3, 32, 32), dtype=jnp.float32)
    params = init_vgg16_params(kp)
    prepared = prepare_params(params)

    fwd = jax.jit(vgg16_forward)
    outs = jax.block_until_ready(fwd(x, prepared))

    expected_shapes = [
        (2, 64, 32, 32), (2, 64, 16, 16),
        (2, 128, 16, 16), (2, 128, 8, 8),
        (2, 256, 8, 8), (2, 256, 8, 8), (2, 256, 4, 4),
        (2, 512, 4, 4), (2, 512, 4, 4), (2, 512, 2, 2),
        (2, 512, 2, 2), (2, 512, 2, 2), (2, 512, 1, 1),
    ]
    assert len(outs) == 13
    for o, s in zip(outs, expected_shapes):
        assert o.shape == s, (o.shape, s)
        assert o.dtype == jnp.float32

    print("KERNEL_OK")
</pallas_src>

<mosaic_0001>
module attributes {stable_mosaic.version = 11 : i64} {
  func.func @_conv1_gemm_kernel(%arg0: i32, %arg1: memref<256x32xbf16, #tpu.memory_space<vmem>>, %arg2: memref<32x64xbf16, #tpu.memory_space<vmem>>, %arg3: memref<1x64xf32, #tpu.memory_space<vmem>>, %arg4: memref<256x64xbf16, #tpu.memory_space<vmem>>) attributes {dimension_semantics = [#tpu.dimension_semantics<parallel>], iteration_bounds = array<i64: 1>, scalar_prefetch = 0 : i64, scratch_operands = 0 : i64, tpu.core_type = #tpu.core_type<tc>, window_params = [{transform_indices = @transform_0, window_bounds = array<i64: 256, 32>}, {pipeline_mode = #tpu.pipeline_mode<synchronous>, transform_indices = @transform_1, window_bounds = array<i64: 32, 64>}, {pipeline_mode = #tpu.pipeline_mode<synchronous>, transform_indices = @transform_2, window_bounds = array<i64: 1, 64>}, {transform_indices = @transform_3, window_bounds = array<i64: 256, 64>}]} {
    %c0 = arith.constant 0 : index
    %c0_0 = arith.constant 0 : index
    %0 = vector.load %arg1[%c0, %c0_0] : memref<256x32xbf16, #tpu.memory_space<vmem>>, vector<256x32xbf16>
    %c0_1 = arith.constant 0 : index
    %c0_2 = arith.constant 0 : index
    %1 = vector.load %arg2[%c0_1, %c0_2] : memref<32x64xbf16, #tpu.memory_space<vmem>>, vector<32x64xbf16>
    %cst = arith.constant dense<0.000000e+00> : vector<256x64xf32>
    %2 = tpu.matmul %0, %1, %cst {dimension_numbers = #tpu.dot_dimension_numbers<[1], [0], [0], [1], [0, 0, 1, 1], [], []>} : vector<256x32xbf16>, vector<32x64xbf16>, vector<256x64xf32> -> vector<256x64xf32>
    %c0_3 = arith.constant 0 : index
    %c0_4 = arith.constant 0 : index
    %3 = vector.load %arg3[%c0_3, %c0_4] : memref<1x64xf32, #tpu.memory_space<vmem>>, vector<1x64xf32>
    %4 = vector.broadcast %3 : vector<1x64xf32> to vector<256x64xf32>
    %5 = arith.addf %2, %4 : vector<256x64xf32>
    %cst_5 = arith.constant 0.000000e+00 : f32
    %6 = vector.broadcast %cst_5 : f32 to vector<256x64xf32>
    %7 = arith.maximumf %5, %6 : vector<256x64xf32>
    %8 = arith.truncf %7 : vector<256x64xf32> to vector<256x64xbf16>
    %c0_6 = arith.constant 0 : index
    %c0_7 = arith.constant 0 : index
    %9 = vector.load %arg4[%c0_6, %c0_7] : memref<256x64xbf16, #tpu.memory_space<vmem>>, vector<256x64xbf16>
    tpu.vector_store %arg4[%c0_6, %c0_7], %8 {strides = array<i32>} : memref<256x64xbf16, #tpu.memory_space<vmem>>, vector<256x64xbf16>,
    return
  }
  func.func @transform_0(%arg0: i32) -> (i32, i32) {
    %c0_i32 = arith.constant 0 : i32
    %c0_i32_0 = arith.constant 0 : i32
    return %arg0, %c0_i32 : i32, i32
  }
  func.func @transform_1(%arg0: i32) -> (i32, i32) {
    %c0_i32 = arith.constant 0 : i32
    %c0_i32_0 = arith.constant 0 : i32
    %c0_i32_1 = arith.constant 0 : i32
    return %c0_i32, %c0_i32_0 : i32, i32
  }
  func.func @transform_2(%arg0: i32) -> (i32, i32) {
    %c0_i32 = arith.constant 0 : i32
    %c0_i32_0 = arith.constant 0 : i32
    %c0_i32_1 = arith.constant 0 : i32
    return %c0_i32, %c0_i32_0 : i32, i32
  }
  func.func @transform_3(%arg0: i32) -> (i32, i32) {
    %c0_i32 = arith.constant 0 : i32
    %c0_i32_0 = arith.constant 0 : i32
    return %arg0, %c0_i32 : i32, i32
  }
}

</mosaic_0001>

<llo_original>
// kernel: tpu_custom_call.1
$region0: #{tpu_custom_call.1}
  #allocation0 [shape = 'u32[]', space=smem, size = 0x4, offset = 0x4, fixed_abs, tag = 'smem constant byte address 0x4 - core index']
  #allocation1 [shape = 'u32[144,128]{1,0:T(1,128)}', space=vmem, size = 0x12000, scoped, tag = 'internal scratch']
  %s0 = inlined_call_operand.vmem [shape: bf16[256,32], index: 0, kind: input, shape index: {}]
  %s1 = inlined_call_operand.vmem [shape: bf16[32,64], index: 1, kind: input, shape index: {}]
  %s2 = inlined_call_operand.vmem [shape: f32[1,64], index: 2, kind: input, shape index: {}]
  %s3 = inlined_call_operand.vmem [shape: bf16[256,64], index: 3, kind: output, shape index: {}]
  %s4 = sld [smem:[#allocation0]]
  $region22: #{tpu_custom_call.1} parent=0
    _
  %s6 = ssub.s32 1, %s4
  %s7 = scalar_select 0, %s6, %s4
  // Predicated region
  $region2: #{tpu_custom_call.1} parent=0 // pred_check
    _
  $region3: #{tpu_custom_call.1} parent=0 // pred_check_branch
    %9 = sbr.rel (0) target = $region5
  $region4: #{tpu_custom_call.1} parent=0 // pred_region
    _
  $region5: #{tpu_custom_call.1} parent=0 // pred_fallthru
    _
  // Predicated region
  $region6: #{tpu_custom_call.1} parent=0 // pred_check
    _
  $region7: #{tpu_custom_call.1} parent=0 // pred_check_branch
    %11 = sbr.rel (0) target = $region9
  $region8: #{tpu_custom_call.1} parent=0 // pred_region
    _
  $region9: #{tpu_custom_call.1} parent=0 // pred_fallthru
    _
  // Predicated region
  $region10: #{tpu_custom_call.1} parent=0 // pred_check
    _
  $region11: #{tpu_custom_call.1} parent=0 // pred_check_branch
    %13 = sbr.rel (0) target = $region13
  $region12: #{tpu_custom_call.1} parent=0 // pred_region
    _
  $region13: #{tpu_custom_call.1} parent=0 // pred_fallthru
    _
  %v15 = vld [vmem:[%s0] sm:$0xf]
  %v16 = vld [vmem:[%s0 + $0x4] sm:$0xf]
  %v17 = vld [vmem:[%s0 + $0x8] sm:$0xf]
  %v18 = vld [vmem:[%s0 + $0xc] sm:$0xf]
  %v19 = vld [vmem:[%s0 + $0x10] sm:$0xf]
  %v20 = vld [vmem:[%s0 + $0x14] sm:$0xf]
  %v21 = vld [vmem:[%s0 + $0x18] sm:$0xf]
  %v22 = vld [vmem:[%s0 + $0x1c] sm:$0xf]
  %v23 = vld [vmem:[%s0 + $0x20] sm:$0xf]
  %v24 = vld [vmem:[%s0 + $0x24] sm:$0xf]
  %v25 = vld [vmem:[%s0 + $0x28] sm:$0xf]
  %v26 = vld [vmem:[%s0 + $0x2c] sm:$0xf]
  %v27 = vld [vmem:[%s0 + $0x30] sm:$0xf]
  %v28 = vld [vmem:[%s0 + $0x34] sm:$0xf]
  %v29 = vld [vmem:[%s0 + $0x38] sm:$0xf]
  %v30 = vld [vmem:[%s0 + $0x3c] sm:$0xf]
  %v31 = vld [vmem:[%s0 + $0x40] sm:$0xf]
  %v32 = vld [vmem:[%s0 + $0x44] sm:$0xf]
  %v33 = vld [vmem:[%s0 + $0x48] sm:$0xf]
  %v34 = vld [vmem:[%s0 + $0x4c] sm:$0xf]
  %v35 = vld [vmem:[%s0 + $0x50] sm:$0xf]
  %v36 = vld [vmem:[%s0 + $0x54] sm:$0xf]
  %v37 = vld [vmem:[%s0 + $0x58] sm:$0xf]
  %v38 = vld [vmem:[%s0 + $0x5c] sm:$0xf]
  %v39 = vld [vmem:[%s0 + $0x60] sm:$0xf]
  %v40 = vld [vmem:[%s0 + $0x64] sm:$0xf]
  %v41 = vld [vmem:[%s0 + $0x68] sm:$0xf]
  %v42 = vld [vmem:[%s0 + $0x6c] sm:$0xf]
  %v43 = vld [vmem:[%s0 + $0x70] sm:$0xf]
  %v44 = vld [vmem:[%s0 + $0x74] sm:$0xf]
  %v45 = vld [vmem:[%s0 + $0x78] sm:$0xf]
  %v46 = vld [vmem:[%s0 + $0x7c] sm:$0xf]
  %v47 = vld [vmem:[%s1] sm:$0xf]
  %v48 = vld [vmem:[%s1 + $0x4] sm:$0xf]
  %v49 = vld [vmem:[%s1 + $0x8] sm:$0xf]
  %v50 = vld [vmem:[%s1 + $0xc] sm:$0xf]
  %v51 = vld [vmem:[%s2] sm:$0x1]
  %v53 = vlaneseq
  %v54 = vshrl.u32 %v53, 7
  %v55 = vsub.s32 0, %v54
  %v56 = vrot.slane %v51, %v55
  %v90 = vunpack.c.l.b16 %v15
  %v91 = vunpack.c.l.b16 %v16
  %v92 = vunpack.c.l.b16 %v17
  %v93 = vunpack.c.l.b16 %v18
  %v94 = vunpack.c.l.b16 %v19
  %v95 = vunpack.c.l.b16 %v20
  %v96 = vunpack.c.l.b16 %v21
  %v97 = vunpack.c.l.b16 %v22
  %v98 = vunpack.c.l.b16 %v23
  %v99 = vunpack.c.l.b16 %v24
  %v100 = vunpack.c.l.b16 %v25
  %v101 = vunpack.c.l.b16 %v26
  %v102 = vunpack.c.l.b16 %v27
  %v103 = vunpack.c.l.b16 %v28
  %v104 = vunpack.c.l.b16 %v29
  %v105 = vunpack.c.l.b16 %v30
  %v106 = vunpack.c.l.b16 %v31
  %v107 = vunpack.c.l.b16 %v32
  %v108 = vunpack.c.l.b16 %v33
  %v109 = vunpack.c.l.b16 %v34
  %v110 = vunpack.c.l.b16 %v35
  %v111 = vunpack.c.l.b16 %v36
  %v112 = vunpack.c.l.b16 %v37
  %v113 = vunpack.c.l.b16 %v38
  %v114 = vunpack.c.l.b16 %v39
  %v115 = vunpack.c.l.b16 %v40
  %v116 = vunpack.c.l.b16 %v41
  %v117 = vunpack.c.l.b16 %v42
  %v118 = vunpack.c.l.b16 %v43
  %v119 = vunpack.c.l.b16 %v44
  %v120 = vunpack.c.l.b16 %v45
  %v121 = vunpack.c.l.b16 %v46
  %v122 = vpack.c.b16 %v91, %v90
  %v123 = vpack.c.b16 %v93, %v92
  %v124 = vpack.c.b16 %v95, %v94
  %v125 = vpack.c.b16 %v97, %v96
  %v126 = vpack.c.b16 %v99, %v98
  %v127 = vpack.c.b16 %v101, %v100
  %v128 = vpack.c.b16 %v103, %v102
  %v129 = vpack.c.b16 %v105, %v104
  %v130 = vpack.c.b16 %v107, %v106
  %v131 = vpack.c.b16 %v109, %v108
  %v132 = vpack.c.b16 %v111, %v110
  %v133 = vpack.c.b16 %v113, %v112
  %v134 = vpack.c.b16 %v115, %v114
  %v135 = vpack.c.b16 %v117, %v116
  %v136 = vpack.c.b16 %v119, %v118
  %v137 = vpack.c.b16 %v121, %v120
  %v142 = vunpack.c.l.b16 %v47
  %v143 = vunpack.c.l.b16 %v48
  %v144 = vunpack.c.l.b16 %v49
  %v145 = vunpack.c.l.b16 %v50
  %v146 = vpack.c.b16 %v143, %v142
  %v147 = vpack.c.b16 %v145, %v144
  %vm150 = vcmask 261120
  %v152 = vsel %vm150, %v122, 0
  %v155 = vsel %vm150, %v123, 0
  %v158 = vsel %vm150, %v124, 0
  %v161 = vsel %vm150, %v125, 0
  %v164 = vsel %vm150, %v126, 0
  %v167 = vsel %vm150, %v127, 0
  %v170 = vsel %vm150, %v128, 0
  %v173 = vsel %vm150, %v129, 0
  %v176 = vsel %vm150, %v130, 0
  %v179 = vsel %vm150, %v131, 0
  %v182 = vsel %vm150, %v132, 0
  %v185 = vsel %vm150, %v133, 0
  %v188 = vsel %vm150, %v134, 0
  %v191 = vsel %vm150, %v135, 0
  %v194 = vsel %vm150, %v136, 0
  %v197 = vsel %vm150, %v137, 0
  %199 = vmatprep.subr.bf16.mxu0 0
  %200 = vmatpush1.bf16.msra.mxu0 %v146
  %201 = vmatprep.subr.bf16.mxu0 0
  %202 = vmatpush1.bf16.msra.mxu0 %v147
  %203 = vmatprep.subr.bf16.mxu0 0
  %204 = vmatpush1.bf16.msra.mxu0 0
  %205 = vmatprep.subr.bf16.mxu0 0
  %206 = vmatpush1.bf16.msra.mxu0 0
  %207 = vmatprep.subr.bf16.mxu0 0
  %208 = vmatpush1.bf16.msra.mxu0 0
  %209 = vmatprep.subr.bf16.mxu0 0
  %210 = vmatpush1.bf16.msra.mxu0 0
  %211 = vmatprep.subr.bf16.mxu0 0
  %212 = vmatpush1.bf16.msra.mxu0 0
  %213 = vmatprep.subr.bf16.mxu0 0
  %214 = vmatpush1.bf16.msra.mxu0 0
  %215 = vmatprep.subr.bf16.mxu0 0
  %216 = vmatpush1.bf16.msra.mxu0 0
  %217 = vmatprep.subr.bf16.mxu0 0
  %218 = vmatpush1.bf16.msra.mxu0 0
  %219 = vmatprep.subr.bf16.mxu0 0
  %220 = vmatpush1.bf16.msra.mxu0 0
  %221 = vmatprep.subr.bf16.mxu0 0
  %222 = vmatpush1.bf16.msra.mxu0 0
  %223 = vmatprep.subr.bf16.mxu0 0
  %224 = vmatpush1.bf16.msra.mxu0 0
  %225 = vmatprep.subr.bf16.mxu0 0
  %226 = vmatpush1.bf16.msra.mxu0 0
  %227 = vmatprep.subr.bf16.mxu0 0
  %228 = vmatpush1.bf16.msra.mxu0 0
  %229 = vmatprep.subr.bf16.mxu0 0
  %230 = vmatpush1.bf16.msra.mxu0 0
  %231 = vmatprep.mubr.bf16.mxu0 0
  %232 = vmatmul.mubr.bf16.gmra.mrb[0].mxu0 %v152
  %v233 = vpop.f32.mrb[0].mxu0
  %v234 = vadd.f32 %v56, %v233
  %v235 = vpop.f32.mrb[0].mxu0
  %v236 = vpop.f32.mrb[0].mxu0
  %v237 = vadd.f32 %v56, %v236
  %v238 = vpop.f32.mrb[0].mxu0
  %239 = vmatprep.mubr.bf16.mxu0 0
  %240 = vmatmul.mubr.bf16.gmra.mrb[0].mxu0 %v155
  %v241 = vpop.f32.mrb[0].mxu0
  %v242 = vadd.f32 %v56, %v241
  %v243 = vpop.f32.mrb[0].mxu0
  %v244 = vpop.f32.mrb[0].mxu0
  %v245 = vadd.f32 %v56, %v244
  %v246 = vpop.f32.mrb[0].mxu0
  %247 = vmatprep.mubr.bf16.mxu0 0
  %248 = vmatmul.mubr.bf16.gmra.mrb[0].mxu0 %v158
  %v249 = vpop.f32.mrb[0].mxu0
  %v250 = vadd.f32 %v56, %v249
  %v251 = vpop.f32.mrb[0].mxu0
  %v252 = vpop.f32.mrb[0].mxu0
  %v253 = vadd.f32 %v56, %v252
  %v254 = vpop.f32.mrb[0].mxu0
  %255 = vmatprep.mubr.bf16.mxu0 0
  %256 = vmatmul.mubr.bf16.gmra.mrb[0].mxu0 %v161
  %v257 = vpop.f32.mrb[0].mxu0
  %v258 = vadd.f32 %v56, %v257
  %v259 = vpop.f32.mrb[0].mxu0
  %v260 = vpop.f32.mrb[0].mxu0
  %v261 = vadd.f32 %v56, %v260
  %v262 = vpop.f32.mrb[0].mxu0
  %263 = vmatprep.mubr.bf16.mxu0 0
  %264 = vmatmul.mubr.bf16.gmra.mrb[0].mxu0 %v164
  %v265 = vpop.f32.mrb[0].mxu0
  %v266 = vadd.f32 %v56, %v265
  %v267 = vpop.f32.mrb[0].mxu0
  %v268 = vpop.f32.mrb[0].mxu0
  %v269 = vadd.f32 %v56, %v268
  %v270 = vpop.f32.mrb[0].mxu0
  %271 = vmatprep.mubr.bf16.mxu0 0
  %272 = vmatmul.mubr.bf16.gmra.mrb[0].mxu0 %v167
  %v273 = vpop.f32.mrb[0].mxu0
  %v274 = vadd.f32 %v56, %v273
  %v275 = vpop.f32.mrb[0].mxu0
  %v276 = vpop.f32.mrb[0].mxu0
  %v277 = vadd.f32 %v56, %v276
  %v278 = vpop.f32.mrb[0].mxu0
  %279 = vmatprep.mubr.bf16.mxu0 0
  %280 = vmatmul.mubr.bf16.gmra.mrb[0].mxu0 %v170
  %v281 = vpop.f32.mrb[0].mxu0
  %v282 = vadd.f32 %v56, %v281
  %v283 = vpop.f32.mrb[0].mxu0
  %v284 = vpop.f32.mrb[0].mxu0
  %v285 = vadd.f32 %v56, %v284
  %v286 = vpop.f32.mrb[0].mxu0
  %287 = vmatprep.mubr.bf16.mxu0 0
  %288 = vmatmul.mubr.bf16.gmra.mrb[0].mxu0 %v173
  %v289 = vpop.f32.mrb[0].mxu0
  %v290 = vadd.f32 %v56, %v289
  %v291 = vpop.f32.mrb[0].mxu0
  %v292 = vpop.f32.mrb[0].mxu0
  %v293 = vadd.f32 %v56, %v292
  %v294 = vpop.f32.mrb[0].mxu0
  %295 = vmatprep.mubr.bf16.mxu0 0
  %296 = vmatmul.mubr.bf16.gmra.mrb[0].mxu0 %v176
  %v297 = vpop.f32.mrb[0].mxu0
  %v298 = vadd.f32 %v56, %v297
  %v299 = vpop.f32.mrb[0].mxu0
  %v300 = vpop.f32.mrb[0].mxu0
  %v301 = vadd.f32 %v56, %v300
  %v302 = vpop.f32.mrb[0].mxu0
  %303 = vmatprep.mubr.bf16.mxu0 0
  %304 = vmatmul.mubr.bf16.gmra.mrb[0].mxu0 %v179
  %v305 = vpop.f32.mrb[0].mxu0
  %v306 = vadd.f32 %v56, %v305
  %v307 = vpop.f32.mrb[0].mxu0
  %v308 = vpop.f32.mrb[0].mxu0
  %v309 = vadd.f32 %v56, %v308
  %v310 = vpop.f32.mrb[0].mxu0
  %311 = vmatprep.mubr.bf16.mxu0 0
  %312 = vmatmul.mubr.bf16.gmra.mrb[0].mxu0 %v182
  %v313 = vpop.f32.mrb[0].mxu0
  %v314 = vadd.f32 %v56, %v313
  %v315 = vpop.f32.mrb[0].mxu0
  %v316 = vpop.f32.mrb[0].mxu0
  %v317 = vadd.f32 %v56, %v316
  %v318 = vpop.f32.mrb[0].mxu0
  %319 = vmatprep.mubr.bf16.mxu0 0
  %320 = vmatmul.mubr.bf16.gmra.mrb[0].mxu0 %v185
  %v321 = vpop.f32.mrb[0].mxu0
  %v322 = vadd.f32 %v56, %v321
  %v323 = vpop.f32.mrb[0].mxu0
  %v324 = vpop.f32.mrb[0].mxu0
  %v325 = vadd.f32 %v56, %v324
  %v326 = vpop.f32.mrb[0].mxu0
  %327 = vmatprep.mubr.bf16.mxu0 0
  %328 = vmatmul.mubr.bf16.gmra.mrb[0].mxu0 %v188
  %v329 = vpop.f32.mrb[0].mxu0
  %v330 = vadd.f32 %v56, %v329
  %v331 = vpop.f32.mrb[0].mxu0
  %v332 = vpop.f32.mrb[0].mxu0
  %v333 = vadd.f32 %v56, %v332
  %v334 = vpop.f32.mrb[0].mxu0
  %335 = vmatprep.mubr.bf16.mxu0 0
  %336 = vmatmul.mubr.bf16.gmra.mrb[0].mxu0 %v191
  %v337 = vpop.f32.mrb[0].mxu0
  %v338 = vadd.f32 %v56, %v337
  %v339 = vpop.f32.mrb[0].mxu0
  %v340 = vpop.f32.mrb[0].mxu0
  %v341 = vadd.f32 %v56, %v340
  %v342 = vpop.f32.mrb[0].mxu0
  %343 = vmatprep.mubr.bf16.mxu0 0
  %344 = vmatmul.mubr.bf16.gmra.mrb[0].mxu0 %v194
  %v345 = vpop.f32.mrb[0].mxu0
  %v346 = vadd.f32 %v56, %v345
  %v347 = vpop.f32.mrb[0].mxu0
  %v348 = vpop.f32.mrb[0].mxu0
  %v349 = vadd.f32 %v56, %v348
  %v350 = vpop.f32.mrb[0].mxu0
  %351 = vmatprep.mubr.bf16.mxu0 0
  %352 = vmatmul.mubr.bf16.gmra.mrb[0].mxu0 %v197
  %v353 = vpop.f32.mrb[0].mxu0
  %v354 = vadd.f32 %v56, %v353
  %v355 = vpop.f32.mrb[0].mxu0
  %v356 = vpop.f32.mrb[0].mxu0
  %v357 = vadd.f32 %v56, %v356
  %v358 = vpop.f32.mrb[0].mxu0
  %359 = vdwg.mxu0
  %v360 = vmax.f32 %v234, 0.0
  %v361 = vmax.f32 %v237, 0.0
  %v362 = vmax.f32 %v242, 0.0
  %v363 = vmax.f32 %v245, 0.0
  %v364 = vmax.f32 %v250, 0.0
  %v365 = vmax.f32 %v253, 0.0
  %v366 = vmax.f32 %v258, 0.0
  %v367 = vmax.f32 %v261, 0.0
  %v368 = vmax.f32 %v266, 0.0
  %v369 = vmax.f32 %v269, 0.0
  %v370 = vmax.f32 %v274, 0.0
  %v371 = vmax.f32 %v277, 0.0
  %v372 = vmax.f32 %v282, 0.0
  %v373 = vmax.f32 %v285, 0.0
  %v374 = vmax.f32 %v290, 0.0
  %v375 = vmax.f32 %v293, 0.0
  %v376 = vmax.f32 %v298, 0.0
  %v377 = vmax.f32 %v301, 0.0
  %v378 = vmax.f32 %v306, 0.0
  %v379 = vmax.f32 %v309, 0.0
  %v380 = vmax.f32 %v314, 0.0
  %v381 = vmax.f32 %v317, 0.0
  %v382 = vmax.f32 %v322, 0.0
  %v383 = vmax.f32 %v325, 0.0
  %v384 = vmax.f32 %v330, 0.0
  %v385 = vmax.f32 %v333, 0.0
  %v386 = vmax.f32 %v338, 0.0
  %v387 = vmax.f32 %v341, 0.0
  %v388 = vmax.f32 %v346, 0.0
  %v389 = vmax.f32 %v349, 0.0
  %v390 = vmax.f32 %v354, 0.0
  %v391 = vmax.f32 %v357, 0.0
  %v392 = vpack.c.bf16 %v361, %v360
  %v393 = vpack.c.bf16 %v363, %v362
  %v394 = vpack.c.bf16 %v365, %v364
  %v395 = vpack.c.bf16 %v367, %v366
  %v396 = vpack.c.bf16 %v369, %v368
  %v397 = vpack.c.bf16 %v371, %v370
  %v398 = vpack.c.bf16 %v373, %v372
  %v399 = vpack.c.bf16 %v375, %v374
  %v400 = vpack.c.bf16 %v377, %v376
  %v401 = vpack.c.bf16 %v379, %v378
  %v402 = vpack.c.bf16 %v381, %v380
  %v403 = vpack.c.bf16 %v383, %v382
  %v404 = vpack.c.bf16 %v385, %v384
  %v405 = vpack.c.bf16 %v387, %v386
  %v406 = vpack.c.bf16 %v389, %v388
  %v407 = vpack.c.bf16 %v391, %v390
  %v424 = vunpack.c.l.b16 %v392
  %v425 = vunpack.c.h.b16 %v392
  %v426 = vunpack.c.l.b16 %v393
  %v427 = vunpack.c.h.b16 %v393
  %v428 = vunpack.c.l.b16 %v394
  %v429 = vunpack.c.h.b16 %v394
  %v430 = vunpack.c.l.b16 %v395
  %v431 = vunpack.c.h.b16 %v395
  %v432 = vunpack.c.l.b16 %v396
  %v433 = vunpack.c.h.b16 %v396
  %v434 = vunpack.c.l.b16 %v397
  %v435 = vunpack.c.h.b16 %v397
  %v436 = vunpack.c.l.b16 %v398
  %v437 = vunpack.c.h.b16 %v398
  %v438 = vunpack.c.l.b16 %v399
  %v439 = vunpack.c.h.b16 %v399
  %v440 = vunpack.c.l.b16 %v400
  %v441 = vunpack.c.h.b16 %v400
  %v442 = vunpack.c.l.b16 %v401
  %v443 = vunpack.c.h.b16 %v401
  %v444 = vunpack.c.l.b16 %v402
  %v445 = vunpack.c.h.b16 %v402
  %v446 = vunpack.c.l.b16 %v403
  %v447 = vunpack.c.h.b16 %v403
  %v448 = vunpack.c.l.b16 %v404
  %v449 = vunpack.c.h.b16 %v404
  %v450 = vunpack.c.l.b16 %v405
  %v451 = vunpack.c.h.b16 %v405
  %v452 = vunpack.c.l.b16 %v406
  %v453 = vunpack.c.h.b16 %v406
  %v454 = vunpack.c.l.b16 %v407
  %v455 = vunpack.c.h.b16 %v407
  %v456 = vpack.c.b16 %v424, %v424
  %v457 = vpack.c.b16 %v425, %v425
  %v458 = vpack.c.b16 %v426, %v426
  %v459 = vpack.c.b16 %v427, %v427
  %v460 = vpack.c.b16 %v428, %v428
  %v461 = vpack.c.b16 %v429, %v429
  %v462 = vpack.c.b16 %v430, %v430
  %v463 = vpack.c.b16 %v431, %v431
  %v464 = vpack.c.b16 %v432, %v432
  %v465 = vpack.c.b16 %v433, %v433
  %v466 = vpack.c.b16 %v434, %v434
  %v467 = vpack.c.b16 %v435, %v435
  %v468 = vpack.c.b16 %v436, %v436
  %v469 = vpack.c.b16 %v437, %v437
  %v470 = vpack.c.b16 %v438, %v438
  %v471 = vpack.c.b16 %v439, %v439
  %v472 = vpack.c.b16 %v440, %v440
  %v473 = vpack.c.b16 %v441, %v441
  %v474 = vpack.c.b16 %v442, %v442
  %v475 = vpack.c.b16 %v443, %v443
  %v476 = vpack.c.b16 %v444, %v444
  %v477 = vpack.c.b16 %v445, %v445
  %v478 = vpack.c.b16 %v446, %v446
  %v479 = vpack.c.b16 %v447, %v447
  %v480 = vpack.c.b16 %v448, %v448
  %v481 = vpack.c.b16 %v449, %v449
  %v482 = vpack.c.b16 %v450, %v450
  %v483 = vpack.c.b16 %v451, %v451
  %v484 = vpack.c.b16 %v452, %v452
  %v485 = vpack.c.b16 %v453, %v453
  %v486 = vpack.c.b16 %v454, %v454
  %v487 = vpack.c.b16 %v455, %v455
  %vm520 = vcmask 519168
  %521 = vst.msk [vmem:[%s3] sm:$0xf] %vm520, %v456
  %522 = vst.msk [vmem:[%s3 + $0x4] sm:$0xf] %vm520, %v457
  %523 = vst.msk [vmem:[%s3 + $0x8] sm:$0xf] %vm520, %v458
  %524 = vst.msk [vmem:[%s3 + $0xc] sm:$0xf] %vm520, %v459
  %525 = vst.msk [vmem:[%s3 + $0x10] sm:$0xf] %vm520, %v460
  %526 = vst.msk [vmem:[%s3 + $0x14] sm:$0xf] %vm520, %v461
  %527 = vst.msk [vmem:[%s3 + $0x18] sm:$0xf] %vm520, %v462
  %528 = vst.msk [vmem:[%s3 + $0x1c] sm:$0xf] %vm520, %v463
  %529 = vst.msk [vmem:[%s3 + $0x20] sm:$0xf] %vm520, %v464
  %530 = vst.msk [vmem:[%s3 + $0x24] sm:$0xf] %vm520, %v465
  %531 = vst.msk [vmem:[%s3 + $0x28] sm:$0xf] %vm520, %v466
  %532 = vst.msk [vmem:[%s3 + $0x2c] sm:$0xf] %vm520, %v467
  %533 = vst.msk [vmem:[%s3 + $0x30] sm:$0xf] %vm520, %v468
  %534 = vst.msk [vmem:[%s3 + $0x34] sm:$0xf] %vm520, %v469
  %535 = vst.msk [vmem:[%s3 + $0x38] sm:$0xf] %vm520, %v470
  %536 = vst.msk [vmem:[%s3 + $0x3c] sm:$0xf] %vm520, %v471
  %537 = vst.msk [vmem:[%s3 + $0x40] sm:$0xf] %vm520, %v472
  %538 = vst.msk [vmem:[%s3 + $0x44] sm:$0xf] %vm520, %v473
  %539 = vst.msk [vmem:[%s3 + $0x48] sm:$0xf] %vm520, %v474
  %540 = vst.msk [vmem:[%s3 + $0x4c] sm:$0xf] %vm520, %v475
  %541 = vst.msk [vmem:[%s3 + $0x50] sm:$0xf] %vm520, %v476
  %542 = vst.msk [vmem:[%s3 + $0x54] sm:$0xf] %vm520, %v477
  %543 = vst.msk [vmem:[%s3 + $0x58] sm:$0xf] %vm520, %v478
  %544 = vst.msk [vmem:[%s3 + $0x5c] sm:$0xf] %vm520, %v479
  %545 = vst.msk [vmem:[%s3 + $0x60] sm:$0xf] %vm520, %v480
  %546 = vst.msk [vmem:[%s3 + $0x64] sm:$0xf] %vm520, %v481
  %547 = vst.msk [vmem:[%s3 + $0x68] sm:$0xf] %vm520, %v482
  %548 = vst.msk [vmem:[%s3 + $0x6c] sm:$0xf] %vm520, %v483
  %549 = vst.msk [vmem:[%s3 + $0x70] sm:$0xf] %vm520, %v484
  %550 = vst.msk [vmem:[%s3 + $0x74] sm:$0xf] %vm520, %v485
  %551 = vst.msk [vmem:[%s3 + $0x78] sm:$0xf] %vm520, %v486
  %552 = vst.msk [vmem:[%s3 + $0x7c] sm:$0xf] %vm520, %v487
  // Predicated region
  $region14: #{tpu_custom_call.1} parent=0 // pred_check
    _
  $region15: #{tpu_custom_call.1} parent=0 // pred_check_branch
    %554 = sbr.rel (0) target = $region17
  $region16: #{tpu_custom_call.1} parent=0 // pred_region
    _
  $region17: #{tpu_custom_call.1} parent=0 // pred_fallthru
    _
  // Predicated region
  $region18: #{tpu_custom_call.1} parent=0 // pred_check
    _
  $region19: #{tpu_custom_call.1} parent=0 // pred_check_branch
    %556 = sbr.rel (0) target = $region21
  $region20: #{tpu_custom_call.1} parent=0 // pred_region
    _
  $region21: #{tpu_custom_call.1} parent=0 // pred_fallthru
    _

</llo_original>
